<compile_context>
chip_gen: v6e
topology: v6e:2x2x1
jax: 0.10.0
libtpu: 0.0.40
codegen_flags: <defaults>
</compile_context>

<pallas_src>
import functools

import jax
import jax.numpy as jnp
from jax.experimental import pallas as pl
from jax.experimental.pallas import tpu as pltpu


# --------------------------------------------------------------------------- #
# Kernel
# --------------------------------------------------------------------------- #
def se_kernel(x_ref, w1t_ref, w2t_ref, o_ref, acc_ref, *, n_full, rem):
    # x_ref:   (b_tile, C, tile_hw)   native dtype (f32/bf16)
    # w1t_ref: (C, Cr)   f32          (W1.T * 1/HW, VMEM-resident)
    # w2t_ref: (Cr, C)   f32          (W2.T, VMEM-resident)
    # o_ref:   (b_tile, C)            gate output (resident across spatial axis)
    # acc_ref: (b_tile, C, 128) f32   chunked running spatial sum (scratch)
    hw_idx = pl.program_id(1)

    @pl.when(hw_idx == 0)
    def _init():
        acc_ref[...] = jnp.zeros_like(acc_ref)

    # Chunked accumulation: cast fused per 128-lane chunk (no full-tile f32
    # temp, no per-step cross-lane reduce).  Static python loop -> unrolled.
    for j in range(n_full):
        acc_ref[...] += x_ref[:, :, pl.ds(j * 128, 128)].astype(jnp.float32)
    if rem:
        acc_ref[:, :, :rem] += x_ref[:, :, pl.ds(n_full * 128, rem)].astype(
            jnp.float32)

    @pl.when(hw_idx == pl.num_programs(1) - 1)
    def _finalize():
        # Single XLU lane-reduce per batch tile; 1/HW already folded into w1t.
        y = jnp.sum(acc_ref[...], axis=-1)                          # (b_tile, C)
        h = jnp.dot(y, w1t_ref[...], preferred_element_type=jnp.float32)
        h = jnp.maximum(h, 0.0)                                     # ReLU
        s = jnp.dot(h, w2t_ref[...], preferred_element_type=jnp.float32)
        o_ref[...] = jax.nn.sigmoid(s).astype(o_ref.dtype)          # Sigmoid


# --------------------------------------------------------------------------- #
# Tiling / VMEM helpers
# --------------------------------------------------------------------------- #
def _vmem_capacity_bytes(default=64 << 20):
    try:
        info = pltpu.get_tpu_info()
        cap = getattr(info, "vmem_capacity_bytes", None)
        return int(cap) if cap else default
    except Exception:
        return default


def _legal_b_tiles(B):
    # Output block is (b_tile, C): b_tile is the second-last dim, so it must be
    # a multiple of 8 or equal to the full batch dim.
    return [d for d in range(1, B + 1) if B % d == 0 and (d % 8 == 0 or d == B)]


def _pick_tile_hw(HW_aligned, C, itemsize, b_min, max_tile_hw, x_budget, n_buf):
    """Largest multiple of 128 dividing HW_aligned that fits the budget."""
    cap = x_budget // max(1, n_buf * b_min * C * itemsize)
    cap = max(128, min(cap, max_tile_hw, HW_aligned))
    cap = (cap // 128) * 128
    tile_hw = 128
    for t in range(128, cap + 1, 128):
        if HW_aligned % t == 0:
            tile_hw = t
    return tile_hw


def _pick_b_tile(B, legal_b, C, tile_hw, itemsize, x_budget, n_buf):
    per_b = n_buf * C * tile_hw * itemsize
    fitting = [d for d in legal_b if d * per_b <= x_budget]
    if not fitting:
        return min(legal_b)           # smallest legal block; may be tight
    # Prefer keeping >= 2 batch tiles (megacore / v7x), then the largest tile.
    multi = [d for d in fitting if B // d >= 2]
    pool = multi if multi else fitting
    return max(pool)


# --------------------------------------------------------------------------- #
# Wrapper
# --------------------------------------------------------------------------- #
def se_layer(x, w1, w2, *, max_tile_hw=4096, x_budget_bytes=None):
    """x: (B, C, H, W) NCHW.  w1: (C//r, C), w2: (C, C//r) PyTorch Linear weights.

    Returns the SE gate with shape (B, C, 1, 1) (same math as the module).
    """
    B, C, H, W = x.shape
    HW = H * W
    Cr = w1.shape[0]
    itemsize = jnp.dtype(x.dtype).itemsize

    # VMEM ceiling with headroom: never ask for all of v7x's 64 MiB physical;
    # use the larger 128 MiB on v5e/v6e.
    vmem_cap = _vmem_capacity_bytes()
    vmem_ceiling = max(16 << 20, min(vmem_cap - (8 << 20), int(vmem_cap * 0.85)))
    if x_budget_bytes is None:
        x_budget_bytes = min(48 << 20, vmem_ceiling // 2)

    # Stream x in its native dtype (no wrapper f32 cast -> no extra HBM copy).
    x_flat = x.reshape(B, C, HW)

    legal_b = _legal_b_tiles(B)
    b_min = min(legal_b)
    n_buf = 2

    # --- spatial tiling ---
    if HW % 128 == 0:
        hw_len = HW
        tile_hw = _pick_tile_hw(hw_len, C, itemsize, b_min, max_tile_hw,
                                x_budget_bytes, n_buf)
    else:
        if n_buf * b_min * C * HW * itemsize <= x_budget_bytes:
            # Copy-free path: one full-HW block per step; tail chunk handled
            # inside the kernel.
            hw_len = HW
            tile_hw = HW
        else:
            # Last resort: zero-pad HW to a multiple of 128 (sum unaffected;
            # 1/HW below uses the true HW), then tile normally.
            hw_len = ((HW + 127) // 128) * 128
            x_flat = jnp.pad(x_flat, ((0, 0), (0, 0), (0, hw_len - HW)))
            tile_hw = _pick_tile_hw(hw_len, C, itemsize, b_min, max_tile_hw,
                                    x_budget_bytes, n_buf)

    # --- batch tiling (prioritise tile_hw; grow b_tile second) ---
    b_tile = _pick_b_tile(B, legal_b, C, tile_hw, itemsize, x_budget_bytes, n_buf)
    hw_tiles = hw_len // tile_hw
    grid = (B // b_tile, hw_tiles)

    # Deeper pipelining when spatial tiles are forced small.
    use_buffered3 = (hw_tiles >= 3 and tile_hw <= 1024 and
                     3 * b_tile * C * tile_hw * itemsize <= x_budget_bytes)
    nb = 3 if use_buffered3 else 2

    # --- weights: fold 1/HW into W1, keep f32, VMEM-resident ---
    inv_hw = 1.0 / float(HW)
    w1t = (jnp.asarray(w1, jnp.float32) * inv_hw).T      # (C, Cr)
    w2t = jnp.asarray(w2, jnp.float32).T                 # (Cr, C)

    # --- explicit scoped-VMEM limit with headroom, clamped below physical ---
    pad8 = lambda n: ((n + 7) // 8) * 8
    pad128 = lambda n: ((n + 127) // 128) * 128
    x_bufs = nb * b_tile * pad8(C) * pad128(tile_hw) * itemsize
    w_bytes = 2 * 4 * (pad8(C) * pad128(Cr) + pad8(Cr) * pad128(C))
    acc_bytes = b_tile * pad8(C) * 128 * 4
    out_bytes = 2 * pad8(b_tile) * pad128(C) * 4
    need = x_bufs + w_bytes + acc_bytes + out_bytes
    vmem_limit = int(min(vmem_ceiling, max(16 << 20, 2 * need)))

    x_spec_kwargs = {}
    if use_buffered3:
        x_spec_kwargs["pipeline_mode"] = pl.Buffered(3)

    gate = pl.pallas_call(
        functools.partial(se_kernel, n_full=tile_hw // 128, rem=tile_hw % 128),
        out_shape=jax.ShapeDtypeStruct((B, C), x.dtype),
        grid_spec=pltpu.PrefetchScalarGridSpec(
            num_scalar_prefetch=0,
            grid=grid,
            in_specs=[
                # x: tiled over batch and spatial (lane) dims.
                pl.BlockSpec((b_tile, C, tile_hw), lambda b, h: (b, 0, h),
                             **x_spec_kwargs),
                # Weights: constant block index -> DMA'd once, stay resident.
                pl.BlockSpec((C, Cr), lambda b, h: (0, 0)),
                pl.BlockSpec((Cr, C), lambda b, h: (0, 0)),
            ],
            # Output constant along the spatial (reduction) axis.
            out_specs=pl.BlockSpec((b_tile, C), lambda b, h: (b, 0)),
            scratch_shapes=[pltpu.VMEM((b_tile, C, 128), jnp.float32)],
        ),
        compiler_params=pltpu.CompilerParams(
            dimension_semantics=("parallel", "arbitrary"),
            vmem_limit_bytes=vmem_limit,
        ),
    )(x_flat, w1t, w2t)
    return gate.reshape(B, C, 1, 1)


# --------------------------------------------------------------------------- #
# Demo / correctness check
# --------------------------------------------------------------------------- #
if __name__ == "__main__":
    # Shapes consistent with SELayer(channel=32, reduction=16): hidden = 2.
    B, C, reduction = 2, 32, 16
    Cr = C // reduction

    key = jax.random.PRNGKey(0)
    kx, kx2, k1, k2 = jax.random.split(key, 4)
    x = jax.random.normal(kx, (B, C, 16, 16), dtype=jnp.float32)    # HW=256
    x2 = jax.random.normal(kx2, (B, C, 12, 12), dtype=jnp.float32)  # HW=144 (tail path)
    # PyTorch Linear weight shapes: (out_features, in_features).
    w1 = jax.random.normal(k1, (Cr, C), dtype=jnp.float32) * (1.0 / jnp.sqrt(C))
    w2 = jax.random.normal(k2, (C, Cr), dtype=jnp.float32) * (1.0 / jnp.sqrt(Cr))

    def ref_gate(xin):
        b, c = xin.shape[:2]
        y = jnp.mean(xin.reshape(b, c, -1), axis=-1)
        h = jnp.maximum(y @ w1.T, 0.0)
        return jax.nn.sigmoid(h @ w2.T).reshape(b, c, 1, 1)

    # Single spatial tile, two spatial tiles (accumulate/finalize path), and a
    # non-128-aligned HW (in-kernel tail chunk, no wrapper padding).
    out_1tile = jax.block_until_ready(se_layer(x, w1, w2))
    out_2tile = jax.block_until_ready(se_layer(x, w1, w2, max_tile_hw=128))
    out_tail = jax.block_until_ready(se_layer(x2, w1, w2))

    assert out_1tile.shape == (B, C, 1, 1)
    assert jnp.allclose(out_1tile, ref_gate(x), atol=1e-5, rtol=1e-5)
    assert jnp.allclose(out_2tile, ref_gate(x), atol=1e-5, rtol=1e-5)
    assert jnp.allclose(out_tail, ref_gate(x2), atol=1e-5, rtol=1e-5)

    print("KERNEL_OK")
</pallas_src>

<mosaic_0001>
module attributes {stable_mosaic.version = 11 : i64} {
  func.func @se_kernel(%arg0: i32, %arg1: i32, %arg2: memref<2x32x256xf32, #tpu.memory_space<vmem>>, %arg3: memref<32x2xf32, #tpu.memory_space<vmem>>, %arg4: memref<2x32xf32, #tpu.memory_space<vmem>>, %arg5: memref<2x32xf32, #tpu.memory_space<vmem>>, %arg6: memref<2x32x128xf32, #tpu.memory_space<vmem>>) attributes {dimension_semantics = [#tpu.dimension_semantics<parallel>, #tpu.dimension_semantics<arbitrary>], iteration_bounds = array<i64: 1, 1>, scalar_prefetch = 0 : i64, scratch_operands = 1 : i64, tpu.core_type = #tpu.core_type<tc>, window_params = [{transform_indices = @transform_0, window_bounds = array<i64: 2, 32, 256>}, {pipeline_mode = #tpu.pipeline_mode<synchronous>, transform_indices = @transform_1, window_bounds = array<i64: 32, 2>}, {pipeline_mode = #tpu.pipeline_mode<synchronous>, transform_indices = @transform_2, window_bounds = array<i64: 2, 32>}, {transform_indices = @transform_3, window_bounds = array<i64: 2, 32>}]} {
    %c0_i32 = arith.constant 0 : i32
    %0 = arith.cmpi eq, %arg1, %c0_i32 : i32
    %1 = arith.extui %0 : i1 to i32
    %c0_i32_0 = arith.constant 0 : i32
    %2 = arith.cmpi ne, %1, %c0_i32_0 : i32
    scf.if %2 {
      %cst = arith.constant 0.000000e+00 : f32
      %14 = vector.broadcast %cst : f32 to vector<2x32x128xf32>
      %c0_19 = arith.constant 0 : index
      %c0_20 = arith.constant 0 : index
      %c0_21 = arith.constant 0 : index
      %15 = vector.load %arg6[%c0_19, %c0_20, %c0_21] : memref<2x32x128xf32, #tpu.memory_space<vmem>>, vector<2x32x128xf32>
      tpu.vector_store %arg6[%c0_19, %c0_20, %c0_21], %14 {strides = array<i32>} : memref<2x32x128xf32, #tpu.memory_space<vmem>>, vector<2x32x128xf32>,
    } else {
    }
    %c0 = arith.constant 0 : index
    %c0_1 = arith.constant 0 : index
    %c0_2 = arith.constant 0 : index
    %3 = vector.load %arg6[%c0, %c0_1, %c0_2] : memref<2x32x128xf32, #tpu.memory_space<vmem>>, vector<2x32x128xf32>
    %c0_3 = arith.constant 0 : index
    %c0_4 = arith.constant 0 : index
    %c0_5 = arith.constant 0 : index
    %4 = vector.load %arg2[%c0_3, %c0_4, %c0_5] : memref<2x32x256xf32, #tpu.memory_space<vmem>>, vector<2x32x128xf32>
    %5 = arith.addf %3, %4 : vector<2x32x128xf32>
    %c0_6 = arith.constant 0 : index
    %c0_7 = arith.constant 0 : index
    %c0_8 = arith.constant 0 : index
    %6 = vector.load %arg6[%c0_6, %c0_7, %c0_8] : memref<2x32x128xf32, #tpu.memory_space<vmem>>, vector<2x32x128xf32>
    tpu.vector_store %arg6[%c0_6, %c0_7, %c0_8], %5 {strides = array<i32>} : memref<2x32x128xf32, #tpu.memory_space<vmem>>, vector<2x32x128xf32>,
    %c0_9 = arith.constant 0 : index
    %c0_10 = arith.constant 0 : index
    %c0_11 = arith.constant 0 : index
    %7 = vector.load %arg6[%c0_9, %c0_10, %c0_11] : memref<2x32x128xf32, #tpu.memory_space<vmem>>, vector<2x32x128xf32>
    %c0_12 = arith.constant 0 : index
    %c0_13 = arith.constant 0 : index
    %c128 = arith.constant 128 : index
    %8 = vector.load %arg2[%c0_12, %c0_13, %c128] : memref<2x32x256xf32, #tpu.memory_space<vmem>>, vector<2x32x128xf32>
    %9 = arith.addf %7, %8 : vector<2x32x128xf32>
    %c0_14 = arith.constant 0 : index
    %c0_15 = arith.constant 0 : index
    %c0_16 = arith.constant 0 : index
    %10 = vector.load %arg6[%c0_14, %c0_15, %c0_16] : memref<2x32x128xf32, #tpu.memory_space<vmem>>, vector<2x32x128xf32>
    tpu.vector_store %arg6[%c0_14, %c0_15, %c0_16], %9 {strides = array<i32>} : memref<2x32x128xf32, #tpu.memory_space<vmem>>, vector<2x32x128xf32>,
    %c0_i32_17 = arith.constant 0 : i32
    %11 = arith.cmpi eq, %arg1, %c0_i32_17 : i32
    %12 = arith.extui %11 : i1 to i32
    %c0_i32_18 = arith.constant 0 : i32
    %13 = arith.cmpi ne, %12, %c0_i32_18 : i32
    scf.if %13 {
      %c0_19 = arith.constant 0 : index
      %c0_20 = arith.constant 0 : index
      %c0_21 = arith.constant 0 : index
      %14 = vector.load %arg6[%c0_19, %c0_20, %c0_21] : memref<2x32x128xf32, #tpu.memory_space<vmem>>, vector<2x32x128xf32>
      %cst = arith.constant dense<0.000000e+00> : vector<2x32xf32>
      %15 = vector.multi_reduction <add>, %14, %cst [2] : vector<2x32x128xf32> to vector<2x32xf32>
      %c0_22 = arith.constant 0 : index
      %c0_23 = arith.constant 0 : index
      %16 = vector.load %arg3[%c0_22, %c0_23] : memref<32x2xf32, #tpu.memory_space<vmem>>, vector<32x2xf32>
      %cst_24 = arith.constant dense<0.000000e+00> : vector<2x2xf32>
      %17 = tpu.matmul %15, %16, %cst_24 {dimension_numbers = #tpu.dot_dimension_numbers<[1], [0], [0], [1], [0, 0, 1, 1], [], []>} : vector<2x32xf32>, vector<32x2xf32>, vector<2x2xf32> -> vector<2x2xf32>
      %cst_25 = arith.constant 0.000000e+00 : f32
      %18 = vector.broadcast %cst_25 : f32 to vector<2x2xf32>
      %19 = arith.maximumf %17, %18 : vector<2x2xf32>
      %c0_26 = arith.constant 0 : index
      %c0_27 = arith.constant 0 : index
      %20 = vector.load %arg4[%c0_26, %c0_27] : memref<2x32xf32, #tpu.memory_space<vmem>>, vector<2x32xf32>
      %cst_28 = arith.constant dense<0.000000e+00> : vector<2x32xf32>
      %21 = tpu.matmul %19, %20, %cst_28 {dimension_numbers = #tpu.dot_dimension_numbers<[1], [0], [0], [1], [0, 0, 1, 1], [], []>} : vector<2x2xf32>, vector<2x32xf32>, vector<2x32xf32> -> vector<2x32xf32>
      %22 = arith.negf %21 : vector<2x32xf32>
      %23 = math.exp %22 : vector<2x32xf32>
      %cst_29 = arith.constant 1.000000e+00 : f32
      %24 = vector.broadcast %cst_29 : f32 to vector<2x32xf32>
      %25 = arith.addf %24, %23 : vector<2x32xf32>
      %26 = arith.divf %24, %25 : vector<2x32xf32>
      %c0_30 = arith.constant 0 : index
      %c0_31 = arith.constant 0 : index
      %27 = vector.load %arg5[%c0_30, %c0_31] : memref<2x32xf32, #tpu.memory_space<vmem>>, vector<2x32xf32>
      tpu.vector_store %arg5[%c0_30, %c0_31], %26 {strides = array<i32>} : memref<2x32xf32, #tpu.memory_space<vmem>>, vector<2x32xf32>,
    } else {
    }
    return
  }
  func.func @transform_0(%arg0: i32, %arg1: i32) -> (i32, i32, i32) {
    %c0_i32 = arith.constant 0 : i32
    %c0_i32_0 = arith.constant 0 : i32
    return %arg0, %c0_i32, %arg1 : i32, i32, i32
  }
  func.func @transform_1(%arg0: i32, %arg1: i32) -> (i32, i32) {
    %c0_i32 = arith.constant 0 : i32
    %c0_i32_0 = arith.constant 0 : i32
    %c0_i32_1 = arith.constant 0 : i32
    return %c0_i32, %c0_i32_0 : i32, i32
  }
  func.func @transform_2(%arg0: i32, %arg1: i32) -> (i32, i32) {
    %c0_i32 = arith.constant 0 : i32
    %c0_i32_0 = arith.constant 0 : i32
    %c0_i32_1 = arith.constant 0 : i32
    return %c0_i32, %c0_i32_0 : i32, i32
  }
  func.func @transform_3(%arg0: i32, %arg1: i32) -> (i32, i32) {
    %c0_i32 = arith.constant 0 : i32
    %c0_i32_0 = arith.constant 0 : i32
    return %arg0, %c0_i32 : i32, i32
  }
}

</mosaic_0001>

<llo_original>
// kernel: tpu_custom_call.1
$region0: #{tpu_custom_call.1}
  #allocation0 [shape = 'u32[]', space=smem, size = 0x4, offset = 0x4, fixed_abs, tag = 'smem constant byte address 0x4 - core index']
  #allocation1 [shape = 'u32[144,128]{1,0:T(1,128)}', space=vmem, size = 0x12000, scoped, tag = 'internal scratch']
  #allocation2 [shape = 'f32[2,32,128]{2,1,0:T(8,128)}', space=vmem, size = 0x8000, scoped, tag = 'scratch operand']
  %s0 = inlined_call_operand.hbm [shape: f32[2,32,256], index: 0, kind: input, shape index: {}]
  %s1 = inlined_call_operand.vmem [shape: f32[32,2], index: 1, kind: input, shape index: {}]
  %s2 = inlined_call_operand.vmem [shape: f32[2,32], index: 2, kind: input, shape index: {}]
  %s3 = inlined_call_operand.hbm [shape: f32[2,32], index: 3, kind: output, shape index: {}]
  %s4 = sld [smem:[#allocation0]]
  $region34: #{tpu_custom_call.1} parent=0
    _
  %s6 = ssub.s32 1, %s4
  %s7 = scalar_select 0, %s6, %s4
  $region1: #{tpu_custom_call.1} parent=0
    #allocation3 [shape = 'u8[65536]{0}', space=vmem, size = 0x10000, scoped, tag = 'input window, operand 0, single buffered']
    #allocation4 [shape = 's32[1]{0}', space=sflag, size = 0x4, scoped, tag = 'scoped memory for tpu_custom_call.1']
    #allocation5 [shape = 's32[1]{0}', space=sflag, size = 0x4, scoped, tag = 'scoped memory for tpu_custom_call.1']
    #allocation6 [shape = 'u8[1024]{0}', space=vmem, size = 0x400, scoped, tag = 'output window, operand 0, single buffered']
    %8 = vsyncpa [#allocation4], 0
    %9 = vsyncpa [#allocation5], 0
    // Predicated region
    $region2: #{tpu_custom_call.1} parent=1 // pred_check
      _
    $region3: #{tpu_custom_call.1} parent=1 // pred_check_branch
      %11 = sbr.rel (0) target = $region5
    $region4: #{tpu_custom_call.1} parent=1 // pred_region
      %s13 = ssub.s32 2048, 2048
      %14 = vsyncadd [#allocation4], %s13
      %s15 = sshll.u32 [#allocation3], 4
      %s16 = int_to_ptr.vmem [resolvable:$true] %s15
      %21 = dma.hbm_to_vmem [thread:$0]  %s0, 2048, %s16, [#allocation4], 256, 256, 16
    $region5: #{tpu_custom_call.1} parent=1 // pred_fallthru
      _
    // Predicated region
    $region6: #{tpu_custom_call.1} parent=1 // pred_check
      _
    $region7: #{tpu_custom_call.1} parent=1 // pred_check_branch
      %23 = sbr.rel (0) target = $region9
    $region8: #{tpu_custom_call.1} parent=1 // pred_region
      _
    $region9: #{tpu_custom_call.1} parent=1 // pred_fallthru
      _
    // Predicated region
    $region10: #{tpu_custom_call.1} parent=1 // pred_check
      _
    $region11: #{tpu_custom_call.1} parent=1 // pred_check_branch
      %25 = sbr.rel (0) target = $region13
    $region12: #{tpu_custom_call.1} parent=1 // pred_region
      _
    $region13: #{tpu_custom_call.1} parent=1 // pred_fallthru
      _
    // Predicated region
    $region14: #{tpu_custom_call.1} parent=1 // pred_check
      _
    $region15: #{tpu_custom_call.1} parent=1 // pred_check_branch
      %27 = sbr.rel (0) target = $region17
    $region16: #{tpu_custom_call.1} parent=1 // pred_region
      %28 = dma.done [#allocation4], 2048
    $region17: #{tpu_custom_call.1} parent=1 // pred_fallthru
      _
    %p29 = scmp.eq.s32.totalorder 0, 0
    // Predicated region
    $region18: #{tpu_custom_call.1} parent=1 // pred_check
      %p30 = pneg %p29
    $region19: #{tpu_custom_call.1} parent=1 // pred_check_branch
      %32 = sbr.rel (%p30) target = $region21
    $region20: #{tpu_custom_call.1} parent=1 // pred_region
      %33 = vst [vmem:[#allocation2] sm:$0xff] 0.0
      %34 = vst [vmem:[#allocation2 + $0x8] sm:$0xff] 0.0
      %35 = vst [vmem:[#allocation2 + $0x10] sm:$0xff] 0.0
      %36 = vst [vmem:[#allocation2 + $0x18] sm:$0xff] 0.0
      %37 = vst [vmem:[#allocation2 + $0x20] sm:$0xff] 0.0
      %38 = vst [vmem:[#allocation2 + $0x28] sm:$0xff] 0.0
      %39 = vst [vmem:[#allocation2 + $0x30] sm:$0xff] 0.0
      %40 = vst [vmem:[#allocation2 + $0x38] sm:$0xff] 0.0
    $region21: #{tpu_custom_call.1} parent=1 // pred_fallthru
      _
    %v41 = vld [vmem:[#allocation2] sm:$0xff]
    %v42 = vld [vmem:[#allocation2 + $0x8] sm:$0xff]
    %v43 = vld [vmem:[#allocation2 + $0x10] sm:$0xff]
    %v44 = vld [vmem:[#allocation2 + $0x18] sm:$0xff]
    %v45 = vld [vmem:[#allocation2 + $0x20] sm:$0xff]
    %v46 = vld [vmem:[#allocation2 + $0x28] sm:$0xff]
    %v47 = vld [vmem:[#allocation2 + $0x30] sm:$0xff]
    %v48 = vld [vmem:[#allocation2 + $0x38] sm:$0xff]
    %v49 = vld [vmem:[#allocation3] sm:$0xff]
    %v50 = vld [vmem:[#allocation3 + $0x10] sm:$0xff]
    %v51 = vld [vmem:[#allocation3 + $0x20] sm:$0xff]
    %v52 = vld [vmem:[#allocation3 + $0x30] sm:$0xff]
    %v53 = vld [vmem:[#allocation3 + $0x40] sm:$0xff]
    %v54 = vld [vmem:[#allocation3 + $0x50] sm:$0xff]
    %v55 = vld [vmem:[#allocation3 + $0x60] sm:$0xff]
    %v56 = vld [vmem:[#allocation3 + $0x70] sm:$0xff]
    %v57 = vadd.f32 %v41, %v49
    %v58 = vadd.f32 %v42, %v50
    %v59 = vadd.f32 %v43, %v51
    %v60 = vadd.f32 %v44, %v52
    %v61 = vadd.f32 %v45, %v53
    %v62 = vadd.f32 %v46, %v54
    %v63 = vadd.f32 %v47, %v55
    %v64 = vadd.f32 %v48, %v56
    %65 = vst [vmem:[#allocation2] sm:$0xff] %v57
    %66 = vst [vmem:[#allocation2 + $0x8] sm:$0xff] %v58
    %67 = vst [vmem:[#allocation2 + $0x10] sm:$0xff] %v59
    %68 = vst [vmem:[#allocation2 + $0x18] sm:$0xff] %v60
    %69 = vst [vmem:[#allocation2 + $0x20] sm:$0xff] %v61
    %70 = vst [vmem:[#allocation2 + $0x28] sm:$0xff] %v62
    %71 = vst [vmem:[#allocation2 + $0x30] sm:$0xff] %v63
    %72 = vst [vmem:[#allocation2 + $0x38] sm:$0xff] %v64
    %v73 = vld [vmem:[#allocation2] sm:$0xff]
    %v74 = vld [vmem:[#allocation2 + $0x8] sm:$0xff]
    %v75 = vld [vmem:[#allocation2 + $0x10] sm:$0xff]
    %v76 = vld [vmem:[#allocation2 + $0x18] sm:$0xff]
    %v77 = vld [vmem:[#allocation2 + $0x20] sm:$0xff]
    %v78 = vld [vmem:[#allocation2 + $0x28] sm:$0xff]
    %v79 = vld [vmem:[#allocation2 + $0x30] sm:$0xff]
    %v80 = vld [vmem:[#allocation2 + $0x38] sm:$0xff]
    %v81 = vld [vmem:[#allocation3 + $0x8] sm:$0xff]
    %v82 = vld [vmem:[#allocation3 + $0x18] sm:$0xff]
    %v83 = vld [vmem:[#allocation3 + $0x28] sm:$0xff]
    %v84 = vld [vmem:[#allocation3 + $0x38] sm:$0xff]
    %v85 = vld [vmem:[#allocation3 + $0x48] sm:$0xff]
    %v86 = vld [vmem:[#allocation3 + $0x58] sm:$0xff]
    %v87 = vld [vmem:[#allocation3 + $0x68] sm:$0xff]
    %v88 = vld [vmem:[#allocation3 + $0x78] sm:$0xff]
    %v89 = vadd.f32 %v73, %v81
    %v90 = vadd.f32 %v74, %v82
    %v91 = vadd.f32 %v75, %v83
    %v92 = vadd.f32 %v76, %v84
    %v93 = vadd.f32 %v77, %v85
    %v94 = vadd.f32 %v78, %v86
    %v95 = vadd.f32 %v79, %v87
    %v96 = vadd.f32 %v80, %v88
    %97 = vst [vmem:[#allocation2] sm:$0xff] %v89
    %98 = vst [vmem:[#allocation2 + $0x8] sm:$0xff] %v90
    %99 = vst [vmem:[#allocation2 + $0x10] sm:$0xff] %v91
    %100 = vst [vmem:[#allocation2 + $0x18] sm:$0xff] %v92
    %101 = vst [vmem:[#allocation2 + $0x20] sm:$0xff] %v93
    %102 = vst [vmem:[#allocation2 + $0x28] sm:$0xff] %v94
    %103 = vst [vmem:[#allocation2 + $0x30] sm:$0xff] %v95
    %104 = vst [vmem:[#allocation2 + $0x38] sm:$0xff] %v96
    // Predicated region
    $region22: #{tpu_custom_call.1} parent=1 // pred_check
      %p105 = pneg %p29
    $region23: #{tpu_custom_call.1} parent=1 // pred_check_branch
      %107 = sbr.rel (%p105) target = $region25
    $region24: #{tpu_custom_call.1} parent=1 // pred_region
      %v108 = vld [vmem:[#allocation2] sm:$0xff]
      %v109 = vld [vmem:[#allocation2 + $0x8] sm:$0xff]
      %v110 = vld [vmem:[#allocation2 + $0x10] sm:$0xff]
      %v111 = vld [vmem:[#allocation2 + $0x18] sm:$0xff]
      %v112 = vld [vmem:[#allocation2 + $0x20] sm:$0xff]
      %v113 = vld [vmem:[#allocation2 + $0x28] sm:$0xff]
      %v114 = vld [vmem:[#allocation2 + $0x30] sm:$0xff]
      %v115 = vld [vmem:[#allocation2 + $0x38] sm:$0xff]
      %116 = vadd.xlane.f32.xlu0 %v108
      %v117 = vpop.xlane.xlu0 %116
      %118 = vadd.xlane.f32.xlu0 %v109
      %v119 = vpop.xlane.xlu0 %118
      %120 = vadd.xlane.f32.xlu0 %v110
      %v121 = vpop.xlane.xlu0 %120
      %122 = vadd.xlane.f32.xlu0 %v111
      %v123 = vpop.xlane.xlu0 %122
      %124 = vadd.xlane.f32.xlu0 %v112
      %v125 = vpop.xlane.xlu0 %124
      %126 = vadd.xlane.f32.xlu0 %v113
      %v127 = vpop.xlane.xlu0 %126
      %128 = vadd.xlane.f32.xlu0 %v114
      %v129 = vpop.xlane.xlu0 %128
      %130 = vadd.xlane.f32.xlu0 %v115
      %v131 = vpop.xlane.xlu0 %130
      %v132 = vld [vmem:[%s1] sm:$0xff]
      %v133 = vld [vmem:[%s1 + $0x8] sm:$0xff]
      %v134 = vld [vmem:[%s1 + $0x10] sm:$0xff]
      %v135 = vld [vmem:[%s1 + $0x18] sm:$0xff]
      %v144 = vlaneseq
      %v145 = vand.u32 %v144, 127
      %v146 = vlaneseq
      %v147 = vshrl.u32 %v146, 7
      %v148 = vsub.s32 %v145, %v147
      %v149 = vrot.slane %v117, %v148
      %v150 = vadd.s32 %v145, 4294967288
      %v151 = vlaneseq
      %v152 = vshrl.u32 %v151, 7
      %v153 = vsub.s32 %v150, %v152
      %v154 = vrot.slane %v119, %v153
      %vm155 = vcmask 130112
      %v156 = vsel %vm155, %v154, %v149
      %v157 = vadd.s32 %v145, 4294967280
      %v158 = vlaneseq
      %v159 = vshrl.u32 %v158, 7
      %v160 = vsub.s32 %v157, %v159
      %v161 = vrot.slane %v121, %v160
      %vm162 = vcmask 195712
      %v163 = vsel %vm162, %v161, %v156
      %v164 = vadd.s32 %v145, 4294967272
      %v165 = vlaneseq
      %v166 = vshrl.u32 %v165, 7
      %v167 = vsub.s32 %v164, %v166
      %v168 = vrot.slane %v123, %v167
      %vm169 = vcmask 261312
      %v170 = vsel %vm169, %v168, %v163
      %v171 = vlaneseq
      %v172 = vshrl.u32 %v171, 7
      %v173 = vsub.s32 %v145, %v172
      %v174 = vrot.slane %v125, %v173
      %v175 = vlaneseq
      %v176 = vshrl.u32 %v175, 7
      %v177 = vsub.s32 %v150, %v176
      %v178 = vrot.slane %v127, %v177
      %v179 = vsel %vm155, %v178, %v174
      %v180 = vlaneseq
      %v181 = vshrl.u32 %v180, 7
      %v182 = vsub.s32 %v157, %v181
      %v183 = vrot.slane %v129, %v182
      %v184 = vsel %vm162, %v183, %v179
      %v185 = vlaneseq
      %v186 = vshrl.u32 %v185, 7
      %v187 = vsub.s32 %v164, %v186
      %v188 = vrot.slane %v131, %v187
      %v189 = vsel %vm169, %v188, %v184
      %vm190 = vcmask 1041409
      %v191 = vsel %vm190, %v189, %v170
      %vm192 = vcmask 261120
      %v193 = vsel %vm192, %v191, 0
      %195 = vmatprep.subr.mxu0 0.0
      %196 = vmatpush1.msra.mxu0 0.0
      %197 = vmatprep.subr.mxu0 0.0
      %198 = vmatpush1.msra.mxu0 0.0
      %199 = vmatprep.subr.mxu0 0.0
      %200 = vmatpush1.msra.mxu0 0.0
      %201 = vmatprep.subr.mxu0 0.0
      %202 = vmatpush1.msra.mxu0 0.0
      %203 = vmatprep.subr.mxu0 0.0
      %204 = vmatpush1.msra.mxu0 0.0
      %205 = vmatprep.subr.mxu0 0.0
      %206 = vmatpush1.msra.mxu0 0.0
      %207 = vmatprep.subr.mxu0 0.0
      %208 = vmatpush1.msra.mxu0 0.0
      %209 = vmatprep.subr.mxu0 0.0
      %210 = vmatpush1.msra.mxu0 0.0
      %211 = vmatprep.subr.mxu0 0.0
      %212 = vmatpush1.msra.mxu0 0.0
      %213 = vmatprep.subr.mxu0 0.0
      %214 = vmatpush1.msra.mxu0 0.0
      %215 = vmatprep.subr.mxu0 0.0
      %216 = vmatpush1.msra.mxu0 0.0
      %217 = vmatprep.subr.mxu0 0.0
      %218 = vmatpush1.msra.mxu0 0.0
      %219 = vmatprep.subr.mxu0 0.0
      %220 = vmatpush1.msra.mxu0 %v135
      %221 = vmatprep.subr.mxu0 0.0
      %222 = vmatpush1.msra.mxu0 %v134
      %223 = vmatprep.subr.mxu0 0.0
      %224 = vmatpush1.msra.mxu0 %v133
      %225 = vmatprep.subr.mxu0 0.0
      %226 = vmatpush1.msra.mxu0 %v132
      %227 = vmatprep.subr.mxu0 0.0
      %228 = vmatpush2.msra.mxu0 0.0
      %229 = vmatprep.subr.mxu0 0.0
      %230 = vmatpush2.msra.mxu0 0.0
      %231 = vmatprep.subr.mxu0 0.0
      %232 = vmatpush2.msra.mxu0 0.0
      %233 = vmatprep.subr.mxu0 0.0
      %234 = vmatpush2.msra.mxu0 0.0
      %235 = vmatprep.subr.mxu0 0.0
      %236 = vmatpush2.msra.mxu0 0.0
      %237 = vmatprep.subr.mxu0 0.0
      %238 = vmatpush2.msra.mxu0 0.0
      %239 = vmatprep.subr.mxu0 0.0
      %240 = vmatpush2.msra.mxu0 0.0
      %241 = vmatprep.subr.mxu0 0.0
      %242 = vmatpush2.msra.mxu0 0.0
      %243 = vmatprep.subr.mxu0 0.0
      %244 = vmatpush2.msra.mxu0 0.0
      %245 = vmatprep.subr.mxu0 0.0
      %246 = vmatpush2.msra.mxu0 0.0
      %247 = vmatprep.subr.mxu0 0.0
      %248 = vmatpush2.msra.mxu0 0.0
      %249 = vmatprep.subr.mxu0 0.0
      %250 = vmatpush2.msra.mxu0 0.0
      %251 = vmatprep.subr.mxu0 0.0
      %252 = vmatpush2.msra.mxu0 0.0
      %253 = vmatprep.subr.mxu0 0.0
      %254 = vmatpush2.msra.mxu0 0.0
      %255 = vmatprep.subr.mxu0 0.0
      %256 = vmatpush2.msra.mxu0 0.0
      %257 = vmatprep.subr.mxu0 0.0
      %258 = vmatpush2.msra.mxu0 0.0
      %259 = vmatprep.mubr.f32.mxu0 0.0
      %260 = vmatmul.mubr.f32.gmra.mxu0 %v193
      %v261 = vpop.f32.mrf.mxu0
      %v262 = vadd.f32 0.0, %v261
      %v263 = vpop.f32.mrf.mxu0
      %264 = vdwg.mxu0
      %v265 = vmax.f32 %v262, 0.0
      %v266 = vld [vmem:[%s2] sm:$0x3]
      %vm267 = vcmask 15360
      %v269 = vsel %vm267, %v265, 0
      %vm271 = vcmask 1041408
      %v273 = vsel %vm271, %v266, 0
      %275 = vmatprep.subr.mxu0 0.0
      %276 = vmatpush1.msra.mxu0 0.0
      %277 = vmatprep.subr.mxu0 0.0
      %278 = vmatpush1.msra.mxu0 0.0
      %279 = vmatprep.subr.mxu0 0.0
      %280 = vmatpush1.msra.mxu0 0.0
      %281 = vmatprep.subr.mxu0 0.0
      %282 = vmatpush1.msra.mxu0 0.0
      %283 = vmatprep.subr.mxu0 0.0
      %284 = vmatpush1.msra.mxu0 0.0
      %285 = vmatprep.subr.mxu0 0.0
      %286 = vmatpush1.msra.mxu0 0.0
      %287 = vmatprep.subr.mxu0 0.0
      %288 = vmatpush1.msra.mxu0 0.0
      %289 = vmatprep.subr.mxu0 0.0
      %290 = vmatpush1.msra.mxu0 0.0
      %291 = vmatprep.subr.mxu0 0.0
      %292 = vmatpush1.msra.mxu0 0.0
      %293 = vmatprep.subr.mxu0 0.0
      %294 = vmatpush1.msra.mxu0 0.0
      %295 = vmatprep.subr.mxu0 0.0
      %296 = vmatpush1.msra.mxu0 0.0
      %297 = vmatprep.subr.mxu0 0.0
      %298 = vmatpush1.msra.mxu0 0.0
      %299 = vmatprep.subr.mxu0 0.0
      %300 = vmatpush1.msra.mxu0 0.0
      %301 = vmatprep.subr.mxu0 0.0
      %302 = vmatpush1.msra.mxu0 0.0
      %303 = vmatprep.subr.mxu0 0.0
      %304 = vmatpush1.msra.mxu0 0.0
      %305 = vmatprep.subr.mxu0 0.0
      %306 = vmatpush1.msra.mxu0 %v273
      %307 = vmatprep.subr.mxu0 0.0
      %308 = vmatpush2.msra.mxu0 0.0
      %309 = vmatprep.subr.mxu0 0.0
      %310 = vmatpush2.msra.mxu0 0.0
      %311 = vmatprep.subr.mxu0 0.0
      %312 = vmatpush2.msra.mxu0 0.0
      %313 = vmatprep.subr.mxu0 0.0
      %314 = vmatpush2.msra.mxu0 0.0
      %315 = vmatprep.subr.mxu0 0.0
      %316 = vmatpush2.msra.mxu0 0.0
      %317 = vmatprep.subr.mxu0 0.0
      %318 = vmatpush2.msra.mxu0 0.0
      %319 = vmatprep.subr.mxu0 0.0
      %320 = vmatpush2.msra.mxu0 0.0
      %321 = vmatprep.subr.mxu0 0.0
      %322 = vmatpush2.msra.mxu0 0.0
      %323 = vmatprep.subr.mxu0 0.0
      %324 = vmatpush2.msra.mxu0 0.0
      %325 = vmatprep.subr.mxu0 0.0
      %326 = vmatpush2.msra.mxu0 0.0
      %327 = vmatprep.subr.mxu0 0.0
      %328 = vmatpush2.msra.mxu0 0.0
      %329 = vmatprep.subr.mxu0 0.0
      %330 = vmatpush2.msra.mxu0 0.0
      %331 = vmatprep.subr.mxu0 0.0
      %332 = vmatpush2.msra.mxu0 0.0
      %333 = vmatprep.subr.mxu0 0.0
      %334 = vmatpush2.msra.mxu0 0.0
      %335 = vmatprep.subr.mxu0 0.0
      %336 = vmatpush2.msra.mxu0 0.0
      %337 = vmatprep.subr.mxu0 0.0
      %338 = vmatpush2.msra.mxu0 0.0
      %339 = vmatprep.mubr.f32.mxu0 0.0
      %340 = vmatmul.mubr.f32.gmra.mxu0 %v269
      %v341 = vpop.f32.mrf.mxu0
      %v342 = vadd.f32 0.0, %v341
      %v343 = vpop.f32.mrf.mxu0
      %344 = vdwg.mxu0
      %v345 = vxor.u32 %v342, 2147483648
      %v346 = vmul.f32 %v345, 1.442695
      %v347 = vpow.pop %v346
      %v348 = vadd.f32 %v347, 1.0
      %v349 = vrcp.pop %v348
      %v350 = vmul.f32 1.0, %v349
      %vm351 = vcmask 254976
      %352 = vst.msk [vmem:[#allocation6] sm:$0x3] %vm351, %v350
    $region25: #{tpu_custom_call.1} parent=1 // pred_fallthru
      _
    // Predicated region
    $region26: #{tpu_custom_call.1} parent=1 // pred_check
      _
    $region27: #{tpu_custom_call.1} parent=1 // pred_check_branch
      %354 = sbr.rel (0) target = $region29
    $region28: #{tpu_custom_call.1} parent=1 // pred_region
      %s356 = ssub.s32 32, 32
      %357 = vsyncadd [#allocation5], %s356
      %s359 = sshll.u32 [#allocation6], 4
      %s360 = int_to_ptr.vmem [resolvable:$true] %s359
      %362 = dma.vmem_to_hbm [thread:$0]  %s360, 32, %s3, [#allocation5]
    $region29: #{tpu_custom_call.1} parent=1 // pred_fallthru
      _
    // Predicated region
    $region30: #{tpu_custom_call.1} parent=1 // pred_check
      _
    $region31: #{tpu_custom_call.1} parent=1 // pred_check_branch
      %364 = sbr.rel (0) target = $region33
    $region32: #{tpu_custom_call.1} parent=1 // pred_region
      %365 = dma.done [#allocation5], 32
    $region33: #{tpu_custom_call.1} parent=1 // pred_fallthru
      _
    %366 = vsyncpa [#allocation4], 1
    %367 = vsyncpa [#allocation5], 1

</llo_original>
